<compile_context>
chip_gen: v6e
topology: v6e:2x2x1
jax: 0.10.0
libtpu: 0.0.40
codegen_flags: <defaults>
</compile_context>

<pallas_src>
import functools

import jax
import jax.numpy as jnp
from jax.experimental import pallas as pl
from jax.experimental.pallas import tpu as pltpu


def _ls_ce_kernel(logits_ref, labels_ref, out_ref, *, smoothing: float,
                  n_valid: int, batch_tile: int):
    """Fused label-smoothing CE partial sum for one batch tile."""
    confidence = 1.0 - smoothing

    x = logits_ref[...]                                          # (TB, C) native dtype
    tb, c = x.shape
    uniform_w = smoothing / float(c)

    labels = labels_ref[...]                                     # (TB, 1) int32
    col_ids = jax.lax.broadcasted_iota(jnp.int32, (1, c), 1)     # (1, C)
    label_mask = col_ids == labels                               # (TB, C) via broadcast

    # x[label]: selection in native dtype (bf16-cheap on v6e/v7x); at most one
    # non-zero per row, so f32 accumulation of the row sum is exact.
    zero = jnp.zeros((), x.dtype)
    x_label = jnp.sum(jnp.where(label_mask, x, zero),
                      axis=-1, keepdims=True, dtype=jnp.float32)  # (TB, 1)

    # sum over classes (for the smoothing/mean term), accumulated in f32.
    sum_x = jnp.sum(x, axis=-1, keepdims=True, dtype=jnp.float32)  # (TB, 1)

    # log-sum-exp in f32.
    m = jnp.max(x, axis=-1, keepdims=True).astype(jnp.float32)     # (TB, 1)
    p = jnp.exp(x.astype(jnp.float32) - m)                         # (TB, C) f32
    lse = jnp.log(jnp.sum(p, axis=-1, keepdims=True))              # (TB, 1)

    # Per row:
    #   loss = confidence*(m+lse - x[label]) + smoothing*(m+lse - mean(x))
    #        = (m + lse) - (confidence*x[label] + (smoothing/C)*sum(x))
    weighted = confidence * x_label + uniform_w * sum_x
    loss = m + lse - weighted                                      # (TB, 1)

    # Mask rows beyond the true batch (boundary-block tail / micro-batch pad).
    i = pl.program_id(0)
    row_ids = i * batch_tile + jax.lax.broadcasted_iota(jnp.int32, (tb, 1), 0)
    loss = jnp.where(row_ids < n_valid, loss, 0.0)

    # Per-tile partial sum, broadcast into a lane-dense (1, 8, 128) block.
    out_ref[...] = jnp.broadcast_to(jnp.sum(loss), out_ref.shape)


def _vmem_capacity_bytes():
    try:
        return int(pltpu.get_tpu_info().vmem_capacity_bytes)
    except Exception:
        return 64 * 1024 * 1024   # conservative (v7x per-TensorCore VMEM)


def _pick_batch_tile(b, c, itemsize, *, max_tile=1024):
    """Largest multiple-of-8 batch tile whose working set fits the VMEM budget.

    Working set per grid step (honest accounting):
      * 2x double-buffered native-dtype logits block: 2 * rows * C * itemsize
      * ~3 full-width f32 in-kernel temporaries (upcast/exp/select):
                                                      3 * rows * C * 4
      * lane-padded labels block (both buffers):      2 * rows * 512
    """
    capacity = _vmem_capacity_bytes()
    budget = int(capacity * 0.45)                 # stay well under vmem_limit
    bytes_per_row = 2 * c * itemsize + 3 * c * 4 + 2 * 512
    rows = budget // max(1, bytes_per_row)
    rows = min(rows, max_tile)
    if b >= 16:
        # Keep >= 2 grid steps so megacore ("parallel" batch axis) can use
        # both v7x TensorCores.
        rows = min(rows, max(8, (((b + 1) // 2) // 8) * 8))
    if b >= 8:
        # Never let a single block overrun the whole (unpadded) batch; ragged
        # remainders are handled by the boundary block + in-kernel row mask.
        rows = min(rows, (b // 8) * 8)
    return max(8, (rows // 8) * 8)


def label_smoothing_ce(logits, labels, *, smoothing: float = 0.1,
                       batch_tile=None):
    """Pallas implementation of LabelSmoothingCE.forward.

    logits: (B, C) float array (f32 or bf16 — consumed in native dtype)
    labels: (B,)   integer class indices
    returns scalar mean loss (float32)
    """
    B, C = logits.shape
    itemsize = jnp.dtype(logits.dtype).itemsize
    if batch_tile is None:
        batch_tile = _pick_batch_tile(B, C, itemsize)

    labels2d = labels.astype(jnp.int32).reshape(B, 1)

    # Only pad for micro-batches (< one sublane); ragged B >= 8 relies on
    # Pallas boundary blocks + the in-kernel row mask (no HBM copy of logits).
    b_arr = B
    if B < 8:
        pad = 8 - B
        logits = jnp.pad(logits, ((0, pad), (0, 0)))
        labels2d = jnp.pad(labels2d, ((0, pad), (0, 0)))
        b_arr = 8

    num_tiles = pl.cdiv(b_arr, batch_tile)
    kernel = functools.partial(_ls_ce_kernel, smoothing=float(smoothing),
                               n_valid=B, batch_tile=batch_tile)

    vmem_limit = min(96 * 1024 * 1024, int(_vmem_capacity_bytes() * 0.7))

    cost = pl.CostEstimate(
        flops=8 * B * C,
        transcendentals=B * C,
        bytes_accessed=B * C * itemsize + B * 4 + num_tiles * 8 * 128 * 4,
    )

    partials = pl.pallas_call(
        kernel,
        out_shape=jax.ShapeDtypeStruct((num_tiles, 8, 128), jnp.float32),
        grid_spec=pltpu.PrefetchScalarGridSpec(
            num_scalar_prefetch=0,
            grid=(num_tiles,),
            in_specs=[
                pl.BlockSpec((batch_tile, C), lambda i: (i, 0)),
                pl.BlockSpec((batch_tile, 1), lambda i: (i, 0)),
            ],
            out_specs=pl.BlockSpec((1, 8, 128), lambda i: (i, 0, 0)),
        ),
        compiler_params=pltpu.CompilerParams(
            dimension_semantics=("parallel",),
            vmem_limit_bytes=vmem_limit,
        ),
        cost_estimate=cost,
    )(logits, labels2d)

    # Final reduction + mean over the true batch size in the wrapper.
    return jnp.sum(partials[:, 0, 0]) / jnp.float32(B)


def _reference(logits, labels, smoothing=0.1):
    confidence = 1.0 - smoothing
    log_probs = jax.nn.log_softmax(logits.astype(jnp.float32), axis=-1)
    nll = -jnp.take_along_axis(log_probs, labels[:, None], axis=-1)[:, 0]
    smooth = -jnp.mean(log_probs, axis=-1)
    return jnp.mean(confidence * nll + smoothing * smooth)


if __name__ == "__main__":
    key = jax.random.PRNGKey(0)
    k1, k2, k3, k4, k5, k6 = jax.random.split(key, 6)

    # Case 1: small aligned problem (matches the module's (N, C) convention).
    B, C = 16, 32
    logits = jax.random.normal(k1, (B, C), dtype=jnp.float32)
    labels = jax.random.randint(k2, (B,), 0, C, dtype=jnp.int32)
    loss = jax.block_until_ready(label_smoothing_ce(logits, labels,
                                                    smoothing=0.1))
    ref = _reference(logits, labels, smoothing=0.1)
    assert jnp.allclose(loss, ref, rtol=1e-5, atol=1e-5), (loss, ref)

    # Case 2: ragged batch (B % batch_tile != 0) -> boundary block + row mask,
    # no wrapper-side padding copy.
    B2, C2 = 13, 37
    logits2 = jax.random.normal(k3, (B2, C2), dtype=jnp.float32)
    labels2 = jax.random.randint(k4, (B2,), 0, C2, dtype=jnp.int32)
    loss2 = jax.block_until_ready(label_smoothing_ce(logits2, labels2,
                                                     smoothing=0.1))
    ref2 = _reference(logits2, labels2, smoothing=0.1)
    assert jnp.allclose(loss2, ref2, rtol=1e-5, atol=1e-5), (loss2, ref2)

    # Case 3: bf16 logits consumed in native dtype (selection path stays bf16,
    # reductions accumulate in f32).
    B3, C3 = 24, 64
    logits3 = jax.random.normal(k5, (B3, C3), dtype=jnp.bfloat16)
    labels3 = jax.random.randint(k6, (B3,), 0, C3, dtype=jnp.int32)
    loss3 = jax.block_until_ready(label_smoothing_ce(logits3, labels3,
                                                     smoothing=0.1))
    ref3 = _reference(logits3, labels3, smoothing=0.1)
    assert jnp.allclose(loss3, ref3, rtol=1e-4, atol=1e-4), (loss3, ref3)

    print("KERNEL_OK")
</pallas_src>

<mosaic_0001>
module attributes {stable_mosaic.version = 11 : i64} {
  func.func @_ls_ce_kernel(%arg0: i32, %arg1: memref<8x32xf32, #tpu.memory_space<vmem>>, %arg2: memref<8x1xi32, #tpu.memory_space<vmem>>, %arg3: memref<1x8x128xf32, #tpu.memory_space<vmem>>) attributes {dimension_semantics = [#tpu.dimension_semantics<parallel>], iteration_bounds = array<i64: 2>, scalar_prefetch = 0 : i64, scratch_operands = 0 : i64, tpu.core_type = #tpu.core_type<tc>, window_params = [{transform_indices = @transform_0, window_bounds = array<i64: 8, 32>}, {transform_indices = @transform_1, window_bounds = array<i64: 8, 1>}, {transform_indices = @transform_2, window_bounds = array<i64: 1, 8, 128>}]} {
    %c0 = arith.constant 0 : index
    %c0_0 = arith.constant 0 : index
    %0 = vector.load %arg1[%c0, %c0_0] : memref<8x32xf32, #tpu.memory_space<vmem>>, vector<8x32xf32>
    %c0_1 = arith.constant 0 : index
    %c0_2 = arith.constant 0 : index
    %1 = vector.load %arg2[%c0_1, %c0_2] : memref<8x1xi32, #tpu.memory_space<vmem>>, vector<8x1xi32>
    %2 = tpu.iota {dimensions = array<i32: 1>} : vector<1x32xi32>
    %3 = vector.broadcast %2 : vector<1x32xi32> to vector<8x32xi32>
    %4 = vector.broadcast %1 : vector<8x1xi32> to vector<8x32xi32>
    %5 = arith.cmpi eq, %3, %4 : vector<8x32xi32>
    %cst = arith.constant 0.000000e+00 : f32
    %6 = vector.broadcast %cst : f32 to vector<8x32xf32>
    %7 = arith.select %5, %0, %6 : vector<8x32xi1>, vector<8x32xf32>
    %cst_3 = arith.constant dense<0.000000e+00> : vector<8xf32>
    %8 = vector.multi_reduction <add>, %7, %cst_3 [1] : vector<8x32xf32> to vector<8xf32>
    %9 = vector.shape_cast %8 : vector<8xf32> to vector<8x1xf32>
    %cst_4 = arith.constant dense<0.000000e+00> : vector<8xf32>
    %10 = vector.multi_reduction <add>, %0, %cst_4 [1] : vector<8x32xf32> to vector<8xf32>
    %11 = vector.shape_cast %10 : vector<8xf32> to vector<8x1xf32>
    %cst_5 = arith.constant dense<0xFF800000> : vector<8xf32>
    %12 = vector.multi_reduction <maximumf>, %0, %cst_5 [1] : vector<8x32xf32> to vector<8xf32>
    %13 = vector.shape_cast %12 : vector<8xf32> to vector<8x1xf32>
    %14 = vector.broadcast %13 : vector<8x1xf32> to vector<8x32xf32>
    %15 = arith.subf %0, %14 : vector<8x32xf32>
    %16 = math.exp %15 : vector<8x32xf32>
    %cst_6 = arith.constant dense<0.000000e+00> : vector<8xf32>
    %17 = vector.multi_reduction <add>, %16, %cst_6 [1] : vector<8x32xf32> to vector<8xf32>
    %18 = vector.shape_cast %17 : vector<8xf32> to vector<8x1xf32>
    %19 = math.log %18 : vector<8x1xf32>
    %cst_7 = arith.constant 0.899999976 : f32
    %20 = vector.broadcast %cst_7 : f32 to vector<8x1xf32>
    %21 = arith.mulf %20, %9 : vector<8x1xf32>
    %cst_8 = arith.constant 3.125000e-03 : f32
    %22 = vector.broadcast %cst_8 : f32 to vector<8x1xf32>
    %23 = arith.mulf %22, %11 : vector<8x1xf32>
    %24 = arith.addf %21, %23 : vector<8x1xf32>
    %25 = arith.addf %13, %19 : vector<8x1xf32>
    %26 = arith.subf %25, %24 : vector<8x1xf32>
    %c8_i32 = arith.constant 8 : i32
    %27 = arith.muli %arg0, %c8_i32 : i32
    %28 = tpu.iota {dimensions = array<i32: 0>} : vector<8x1xi32>
    %29 = vector.broadcast %27 : i32 to vector<8x1xi32>
    %30 = arith.addi %29, %28 : vector<8x1xi32>
    %c16_i32 = arith.constant 16 : i32
    %31 = vector.broadcast %c16_i32 : i32 to vector<8x1xi32>
    %32 = arith.cmpi slt, %30, %31 : vector<8x1xi32>
    %cst_9 = arith.constant 0.000000e+00 : f32
    %33 = vector.broadcast %cst_9 : f32 to vector<8x1xf32>
    %34 = arith.select %32, %26, %33 : vector<8x1xi1>, vector<8x1xf32>
    %35 = vector.shape_cast %34 : vector<8x1xf32> to vector<1x8x1xf32>
    %cst_10 = arith.constant dense<0.000000e+00> : vector<1xf32>
    %36 = vector.multi_reduction <add>, %35, %cst_10 [1, 2] : vector<1x8x1xf32> to vector<1xf32>
    %37 = vector.shape_cast %36 : vector<1xf32> to vector<1x1x1xf32>
    %38 = vector.extract %37[0, 0, 0] : f32 from vector<1x1x1xf32>
    %39 = vector.broadcast %38 : f32 to vector<1x8x128xf32>
    %c0_11 = arith.constant 0 : index
    %c0_12 = arith.constant 0 : index
    %c0_13 = arith.constant 0 : index
    %40 = vector.load %arg3[%c0_11, %c0_12, %c0_13] : memref<1x8x128xf32, #tpu.memory_space<vmem>>, vector<1x8x128xf32>
    tpu.vector_store %arg3[%c0_11, %c0_12, %c0_13], %39 {strides = array<i32>} : memref<1x8x128xf32, #tpu.memory_space<vmem>>, vector<1x8x128xf32>,
    return
  }
  func.func @transform_0(%arg0: i32) -> (i32, i32) {
    %c0_i32 = arith.constant 0 : i32
    %c0_i32_0 = arith.constant 0 : i32
    return %arg0, %c0_i32 : i32, i32
  }
  func.func @transform_1(%arg0: i32) -> (i32, i32) {
    %c0_i32 = arith.constant 0 : i32
    %c0_i32_0 = arith.constant 0 : i32
    return %arg0, %c0_i32 : i32, i32
  }
  func.func @transform_2(%arg0: i32) -> (i32, i32, i32) {
    %c0_i32 = arith.constant 0 : i32
    %c0_i32_0 = arith.constant 0 : i32
    %c0_i32_1 = arith.constant 0 : i32
    return %arg0, %c0_i32, %c0_i32_0 : i32, i32, i32
  }
}

</mosaic_0001>

<llo_original>
// kernel: tpu_custom_call.1
$region0: #{tpu_custom_call.1}
  #allocation0 [shape = 'u32[]', space=smem, size = 0x4, offset = 0x4, fixed_abs, tag = 'smem constant byte address 0x4 - core index']
  #allocation1 [shape = 'u32[144,128]{1,0:T(1,128)}', space=vmem, size = 0x12000, scoped, tag = 'internal scratch']
  %s0 = inlined_call_operand.vmem [shape: f32[16,32], index: 0, kind: input, shape index: {}]
  %s1 = inlined_call_operand.vmem [shape: s32[16,1], index: 1, kind: input, shape index: {}]
  %s2 = inlined_call_operand.hbm [shape: f32[2,8,128], index: 2, kind: output, shape index: {}]
  %s3 = sld [smem:[#allocation0]]
  $region41: #{tpu_custom_call.1} parent=0
    _
  %s5 = ssub.s32 1, %s3
  %s6 = scalar_select 0, %s5, %s3
  $region1: #{tpu_custom_call.1} parent=0
    #allocation2 [shape = 'u8[8192]{0}', space=vmem, size = 0x2000, scoped, tag = 'output window, operand 0']
    #allocation3 [shape = 's32[2]{0}', space=sflag, size = 0x8, scoped, tag = 'scoped memory for tpu_custom_call.1']
    %7 = vsyncpa [#allocation3], 0
    %s8 = scalar_lea.sflag [#allocation3], 1
    %9 = vsyncpa %s8, 0
    loop: start=0, step=1, limit=4
    $region2: #{tpu_custom_call.1} parent=1 // loop_pre_header
      _
    $region3: #{tpu_custom_call.1} parent=1 // loop_header
      %s11 = sphi 0, %s15
      %p12 = scmp.ge.s32.totalorder %s11, 4
      %s21 = sphi 0, %s23
      %s24 = sphi 0, %s21
      %s25 = sphi 0, %s24
      %s41 = sphi 0, %s25
      %s47 = sphi 0, %s49
      %s50 = sphi 0, %s47
      %s51 = sphi 0, %s50
      %s67 = sphi 0, %s51
      %s73 = sphi 0, %s75
      %s76 = sphi 0, %s73
      %s77 = sphi 0, %s76
      %s93 = sphi 0, %s77
    $region4: #{tpu_custom_call.1} parent=1 // loop_header_branch
      %14 = sbr.rel (%p12) target = $region8
    $region5: #{tpu_custom_call.1} parent=1 // loop_body
      %s16 = ssub.s32 %s11, 1
      %s17 = ssub.s32 %s11, 2
      %s18 = sadd.s32 %s11, 1
      %s19 = ssub.s32 %s11, %s18
      %p20 = scmp.eq.s32.totalorder %s19, 0
      %s22 = sadd.s32 %s21, 1
      %s23 = scalar_select %p20, %s21, %s22
      %p26 = pneg %p20
      %p27 = scmp.eq.s32.totalorder %s11, 1
      %p28 = por %p26, %p27
      %p29 = scmp.ne.s32.totalorder %s21, %s24
      %p30 = scmp.eq.s32.totalorder %s11, 0
      %p31 = por %p29, %p30
      %p32 = scmp.ne.s32.totalorder %s21, %s24
      %p33 = scmp.eq.s32.totalorder %s16, 1
      %p34 = por %p32, %p33
      %p35 = scmp.ne.s32.totalorder %s24, %s25
      %p36 = scmp.eq.s32.totalorder %s16, 0
      %p37 = por %p35, %p36
      %p38 = scmp.ne.s32.totalorder %s24, %s25
      %p39 = scmp.eq.s32.totalorder %s17, 1
      %p40 = por %p38, %p39
      %p42 = scmp.ne.s32.totalorder %s25, %s41
      %p43 = scmp.eq.s32.totalorder %s17, 0
      %p44 = por %p42, %p43
      %s45 = ssub.s32 %s11, %s18
      %p46 = scmp.eq.s32.totalorder %s45, 0
      %s48 = sadd.s32 %s47, 1
      %s49 = scalar_select %p46, %s47, %s48
      %p52 = pneg %p46
      %p53 = scmp.eq.s32.totalorder %s11, 1
      %p54 = por %p52, %p53
      %p55 = scmp.ne.s32.totalorder %s47, %s50
      %p56 = scmp.eq.s32.totalorder %s11, 0
      %p57 = por %p55, %p56
      %p58 = scmp.ne.s32.totalorder %s47, %s50
      %p59 = scmp.eq.s32.totalorder %s16, 1
      %p60 = por %p58, %p59
      %p61 = scmp.ne.s32.totalorder %s50, %s51
      %p62 = scmp.eq.s32.totalorder %s16, 0
      %p63 = por %p61, %p62
      %p64 = scmp.ne.s32.totalorder %s50, %s51
      %p65 = scmp.eq.s32.totalorder %s17, 1
      %p66 = por %p64, %p65
      %p68 = scmp.ne.s32.totalorder %s51, %s67
      %p69 = scmp.eq.s32.totalorder %s17, 0
      %p70 = por %p68, %p69
      %s71 = ssub.s32 %s11, %s18
      %p72 = scmp.eq.s32.totalorder %s71, 0
      %s74 = sadd.s32 %s73, 1
      %s75 = scalar_select %p72, %s73, %s74
      %p78 = pneg %p72
      %p79 = scmp.eq.s32.totalorder %s11, 1
      %p80 = por %p78, %p79
      %p81 = scmp.ne.s32.totalorder %s73, %s76
      %p82 = scmp.eq.s32.totalorder %s11, 0
      %p83 = por %p81, %p82
      %p84 = scmp.ne.s32.totalorder %s73, %s76
      %p85 = scmp.eq.s32.totalorder %s16, 1
      %p86 = por %p84, %p85
      %p87 = scmp.ne.s32.totalorder %s76, %s77
      %p88 = scmp.eq.s32.totalorder %s16, 0
      %p89 = por %p87, %p88
      %p90 = scmp.ne.s32.totalorder %s76, %s77
      %p91 = scmp.eq.s32.totalorder %s17, 1
      %p92 = por %p90, %p91
      %p94 = scmp.ne.s32.totalorder %s77, %s93
      %p95 = scmp.eq.s32.totalorder %s17, 0
      %p96 = por %p94, %p95
      %p97 = scmp.le.s32.totalorder 1, %s11
      %p98 = scmp.lt.s32.totalorder %s11, 3
      %p99 = pnand %p97, %p98
      %p100 = pneg %p99
      // Predicated region
      $region9: #{tpu_custom_call.1} parent=5 // pred_check
        _
      $region10: #{tpu_custom_call.1} parent=5 // pred_check_branch
        %102 = sbr.rel (%p99) target = $region12
      $region11: #{tpu_custom_call.1} parent=5 // pred_region
        %s103 = ssub.s32 %s11, 1
      $region12: #{tpu_custom_call.1} parent=5 // pred_fallthru
        _
      %p104 = scmp.lt.s32.totalorder %s11, 2
      // Predicated region
      $region13: #{tpu_custom_call.1} parent=5 // pred_check
        %p105 = pneg %p104
      $region14: #{tpu_custom_call.1} parent=5 // pred_check_branch
        %107 = sbr.rel (%p105) target = $region16
      $region15: #{tpu_custom_call.1} parent=5 // pred_region
        // Predicated region
        $region17: #{tpu_custom_call.1} parent=15 // pred_check
          %p108 = pneg %p31
        $region18: #{tpu_custom_call.1} parent=15 // pred_check_branch
          %110 = sbr.rel (%p108) target = $region20
        $region19: #{tpu_custom_call.1} parent=15 // pred_region
          %p111 = scmp.lt.s32.totalorder %s11, 1
          %s112 = scalar_select %p111, %s11, 1
          %s113 = smul.addr %s112, 8
          %s114 = scalar_lea.vmem %s0, %s113
        $region20: #{tpu_custom_call.1} parent=15 // pred_fallthru
          _
        // Predicated region
        $region21: #{tpu_custom_call.1} parent=15 // pred_check
          %p115 = pneg %p57
        $region22: #{tpu_custom_call.1} parent=15 // pred_check_branch
          %117 = sbr.rel (%p115) target = $region24
        $region23: #{tpu_custom_call.1} parent=15 // pred_region
          %p118 = scmp.lt.s32.totalorder %s11, 1
          %s119 = scalar_select %p118, %s11, 1
          %s120 = smul.addr %s119, 8
          %s121 = scalar_lea.vmem %s1, %s120
        $region24: #{tpu_custom_call.1} parent=15 // pred_fallthru
          _
      $region16: #{tpu_custom_call.1} parent=5 // pred_fallthru
        _
      %p122 = scmp.le.s32.totalorder 1, %s11
      %p123 = scmp.lt.s32.totalorder %s11, 3
      %p124 = pnand %p122, %p123
      %p125 = pneg %p124
      // Predicated region
      $region25: #{tpu_custom_call.1} parent=5 // pred_check
        _
      $region26: #{tpu_custom_call.1} parent=5 // pred_check_branch
        %127 = sbr.rel (%p124) target = $region28
      $region27: #{tpu_custom_call.1} parent=5 // pred_region
        %s128 = ssub.s32 %s11, 1
        %p129 = scmp.lt.s32.totalorder %s16, 1
        %s130 = scalar_select %p129, %s16, 1
        %s131 = smul.addr %s130, 8
        %s132 = scalar_lea.vmem %s0, %s131
        %p133 = pneg %p37
        %p134 = pneg %p34
        %p135 = scmp.lt.s32.totalorder %s16, 1
        %s136 = scalar_select %p135, %s16, 1
        %s137 = smul.addr %s136, 8
        %s138 = scalar_lea.vmem %s1, %s137
        %p139 = pneg %p63
        %p140 = pneg %p60
        %p141 = pneg %p89
        %p142 = pneg %p86
        %s143 = sand.u32 %s76, 1
        %s144 = scalar_lea.sflag [#allocation3], %s143
        %s145 = sand.u32 %s76, 1
        %s146 = smul.addr %s145, 8
        %s147 = scalar_lea.vmem [#allocation2], %s146
        %p148 = scmp.lt.s32.totalorder %s16, 1
        %s149 = scalar_select %p148, %s16, 1
        %s150 = smul.addr %s149, 8
        %s151 = scalar_lea.vmem %s0, %s150
        %p152 = scmp.lt.s32.totalorder %s16, 1
        %s153 = scalar_select %p152, %s16, 1
        %s154 = smul.addr %s153, 8
        %s155 = scalar_lea.vmem %s1, %s154
        %v156 = vld [vmem:[%s151] sm:$0xff]
        %v157 = vld [vmem:[%s155] sm:$0xff]
        %v158 = vlaneseq
        %v159 = vand.u32 %v158, 127
        %160 = vset.pattern.permute.xlu0 0
        %161 = vperm.xlu0 %160, %v157
        %v162 = vpop.permute.xlu0 %161
        %vm163 = vcmp.eq.s32.totalorder %v159, %v162
        %v164 = vsel %vm163, %v156, 0.0
        %vm165 = vcmask 261120
        %v166 = vsel %vm165, %v164, 0.0
        %167 = vadd.xlane.f32.xlu0 %v166
        %v168 = vpop.xlane.xlu0 %167
        %v169 = vsel %vm165, %v156, 0.0
        %170 = vadd.xlane.f32.xlu0 %v169
        %v171 = vpop.xlane.xlu0 %170
        %v172 = vsel %vm165, %v156, -inf
        %173 = vmax.xlane.f32.xlu0 %v172
        %v174 = vpop.xlane.xlu0 %173
        %v175 = vsub.f32 %v156, %v174
        %v176 = vmul.f32 %v175, 1.442695
        %v177 = vpow.pop %v176
        %v178 = vsel %vm165, %v177, 0.0
        %179 = vadd.xlane.f32.xlu0 %v178
        %v180 = vpop.xlane.xlu0 %179
        %v181 = vlog2.pop %v180
        %v182 = vmul.f32 %v181, 0.6931472
        %v183 = vmul.f32 %v168, 0.9
        %v184 = vmul.f32 %v171, 0.003125
        %v185 = vadd.f32 %v183, %v184
        %v186 = vadd.f32 %v174, %v182
        %v187 = vsub.f32 %v186, %v185
        %s188 = smul.u32 %s16, 8
        %v189 = vlaneseq
        %v190 = vshrl.u32 %v189, 7
        %v191 = vstv %s188
        %v192 = vadd.s32 %v191, %v190
        %vm193 = vcmp.lt.s32.totalorder %v192, 16
        %v194 = vsel %vm193, %v187, 0.0
        %vm195 = vcmask 7168
        %v196 = vsel %vm195, %v194, 0.0
        %197 = vadd.xlane.f32.xlu0 %v196
        %v198 = vpop.xlane.xlu0 %197
        %v199 = vrot.slane %v198, 4
        %v200 = vadd.f32 %v198, %v199
        %v201 = vrot.slane %v200, 2
        %v202 = vadd.f32 %v200, %v201
        %v203 = vrot.slane %v202, 1
        %v204 = vadd.f32 %v202, %v203
        %s205 = vtos %v204
        %v206 = vstv %s205
        %207 = vst [vmem:[%s147] sm:$0xff] %v206
        %s208 = sand.u32 %s76, 1
        %s209 = scalar_lea.sflag [#allocation3], %s208
        %s210 = sand.u32 %s76, 1
        %s211 = smul.addr %s210, 8
        %s212 = scalar_lea.vmem [#allocation2], %s211
        // Predicated region
        $region29: #{tpu_custom_call.1} parent=27 // pred_check
          %p213 = pneg %p86
        $region30: #{tpu_custom_call.1} parent=27 // pred_check_branch
          %215 = sbr.rel (%p213) target = $region32
        $region31: #{tpu_custom_call.1} parent=27 // pred_region
          %s217 = ssub.s32 128, 128
          %218 = vsyncadd %s209, %s217
          %s219 = smul.addr %s16, 128
          %s220 = scalar_lea.hbm %s2, %s219
          %s222 = sshll.u32 %s212, 4
          %s223 = int_to_ptr.vmem [resolvable:$true] %s222
          %225 = dma.vmem_to_hbm [thread:$0]  %s223, 128, %s220, %s209
        $region32: #{tpu_custom_call.1} parent=27 // pred_fallthru
          _
      $region28: #{tpu_custom_call.1} parent=5 // pred_fallthru
        _
      %p226 = scmp.le.s32.totalorder 2, %s11
      // Predicated region
      $region33: #{tpu_custom_call.1} parent=5 // pred_check
        %p227 = pneg %p226
      $region34: #{tpu_custom_call.1} parent=5 // pred_check_branch
        %229 = sbr.rel (%p227) target = $region36
      $region35: #{tpu_custom_call.1} parent=5 // pred_region
        %s230 = ssub.s32 %s11, 2
        // Predicated region
        $region37: #{tpu_custom_call.1} parent=35 // pred_check
          %p231 = pneg %p92
        $region38: #{tpu_custom_call.1} parent=35 // pred_check_branch
          %233 = sbr.rel (%p231) target = $region40
        $region39: #{tpu_custom_call.1} parent=35 // pred_region
          %s234 = sand.u32 %s77, 1
          %s235 = scalar_lea.sflag [#allocation3], %s234
          %s236 = sand.u32 %s77, 1
          %s237 = smul.addr %s236, 8
          %s238 = scalar_lea.vmem [#allocation2], %s237
          %239 = dma.done %s235, 128
        $region40: #{tpu_custom_call.1} parent=35 // pred_fallthru
          _
      $region36: #{tpu_custom_call.1} parent=5 // pred_fallthru
        _
    $region6: #{tpu_custom_call.1} parent=1 // loop_footer
      %s15 = sadd.s32 1, %s11
    $region7: #{tpu_custom_call.1} parent=1 // loop_footer_branch
      %10 = sbr.rel target = $region3
    $region8: #{tpu_custom_call.1} parent=1 // loop_exit
      _
    %240 = vsyncpa [#allocation3], 1
    %s241 = scalar_lea.sflag [#allocation3], 1
    %242 = vsyncpa %s241, 1

</llo_original>
